<compile_context>
chip_gen: v7x
topology: tpu7x:2x2x1
jax: 0.10.0
libtpu: 0.0.40
codegen_flags: <defaults>
</compile_context>

<pallas_src>
import jax
import jax.numpy as jnp
from jax.experimental import pallas as pl
from jax.experimental.pallas import tpu as pltpu


def _st_kernel(src_ref, flow_ref, grid_ref, out_ref):
    # src_ref : (1, C*H, W)   whole source image for this batch element
    # flow_ref: (1, 2, Tp)    flow for this tile of output pixels (row 0: dH, row 1: dW)
    # grid_ref: (2, Tp)       identity grid (row 0: pixel row iy, row 1: pixel col ix)
    # out_ref : (1, C, Tp)
    CH, W = src_ref.shape[1], src_ref.shape[2]
    C, Tp = out_ref.shape[1], out_ref.shape[2]
    H = CH // C

    fl = flow_ref[0]                      # (2, Tp)
    gr = grid_ref[...]                    # (2, Tp)

    # sample coordinates in pixel units (normalize/unnormalize round trip removed)
    sy = gr[0:1, :] + fl[0:1, :]          # (1, Tp)
    sx = gr[1:2, :] + fl[1:2, :]          # (1, Tp)

    y0 = jnp.floor(sy)
    y1 = y0 + 1.0
    x0 = jnp.floor(sx)
    x1 = x0 + 1.0
    wy1 = sy - y0
    wy0 = 1.0 - wy1
    wx1 = sx - x0
    wx0 = 1.0 - wx1

    hf = jnp.float32(H - 1)
    wf = jnp.float32(W - 1)
    # padding_mode='zeros': out-of-bounds corners contribute nothing
    wy0 = wy0 * ((y0 >= 0.0) & (y0 <= hf)).astype(jnp.float32)
    wy1 = wy1 * ((y1 >= 0.0) & (y1 <= hf)).astype(jnp.float32)
    wx0 = wx0 * ((x0 >= 0.0) & (x0 <= wf)).astype(jnp.float32)
    wx1 = wx1 * ((x1 >= 0.0) & (x1 <= wf)).astype(jnp.float32)

    x0c = jnp.clip(x0, 0.0, wf).astype(jnp.int32)   # (1, Tp)
    x1c = jnp.clip(x1, 0.0, wf).astype(jnp.int32)
    y0c = jnp.clip(y0, 0.0, hf).astype(jnp.int32)
    y1c = jnp.clip(y1, 0.0, hf).astype(jnp.int32)

    # Column (W-axis) interpolation weights: cw[w, p] = wx0[p]*(w==x0[p]) + wx1[p]*(w==x1[p])
    wcol = jax.lax.broadcasted_iota(jnp.int32, (W, Tp), 0)
    cw = (wcol == x0c).astype(jnp.float32) * wx0 + (wcol == x1c).astype(jnp.float32) * wx1

    # Row (H-axis) interpolation weights: rw[h, p] = wy0[p]*(h==y0[p]) + wy1[p]*(h==y1[p])
    hrow = jax.lax.broadcasted_iota(jnp.int32, (H, Tp), 0)
    rw = (hrow == y0c).astype(jnp.float32) * wy0 + (hrow == y1c).astype(jnp.float32) * wy1

    # W-axis gather + lerp on the MXU: (C*H, W) @ (W, Tp) -> (C*H, Tp)
    tmp = jnp.dot(src_ref[0], cw, preferred_element_type=jnp.float32)

    # H-axis gather + lerp: weight the H rows per pixel and reduce over H.
    out = jnp.sum(tmp.reshape(C, H, Tp) * rw[None, :, :], axis=1)    # (C, Tp)
    out_ref[0] = out.astype(out_ref.dtype)


def spatial_transformer(src, flow, *, tile_p=None):
    """Pallas equivalent of SpatialTransformer(size=(H, W), mode='bilinear')(src, flow)."""
    N, C, H, W = src.shape
    assert flow.shape == (N, 2, H, W), (src.shape, flow.shape)
    HW = H * W

    if tile_p is None:
        # Biggest lane-dense pixel tile whose working set (dominated by the (C*H, tile_p)
        # f32 intermediate) stays well under scoped VMEM on v5e/v6e/v7x.
        budget = 8 * 1024 * 1024
        cap = max(128, min(2048, (budget // (4 * C * H)) // 128 * 128))
        if HW <= cap:
            tile_p = HW
        else:
            tile_p = next((t for t in range(cap, 127, -128) if HW % t == 0), HW)
    assert HW % tile_p == 0

    # identity grid, precomputed like the module's registered buffer (row idx, col idx)
    gy, gx = jnp.meshgrid(jnp.arange(H, dtype=src.dtype),
                          jnp.arange(W, dtype=src.dtype), indexing="ij")
    ident_grid = jnp.stack([gy.reshape(HW), gx.reshape(HW)])          # (2, HW)

    out_flat = pl.pallas_call(
        _st_kernel,
        out_shape=jax.ShapeDtypeStruct((N, C, HW), src.dtype),
        grid=(N, HW // tile_p),
        in_specs=[
            pl.BlockSpec((1, C * H, W), lambda n, p: (n, 0, 0)),      # whole image per batch
            pl.BlockSpec((1, 2, tile_p), lambda n, p: (n, 0, p)),     # flow tile (lane-dense)
            pl.BlockSpec((2, tile_p), lambda n, p: (0, p)),           # identity-grid tile
        ],
        out_specs=pl.BlockSpec((1, C, tile_p), lambda n, p: (n, 0, p)),
        compiler_params=pltpu.CompilerParams(
            dimension_semantics=("parallel", "parallel"),
            vmem_limit_bytes=32 * 1024 * 1024,
        ),
    )(src.reshape(N, C * H, W), flow.reshape(N, 2, HW), ident_grid)

    return out_flat.reshape(N, C, H, W)


def _reference_grid_sample(src, flow):
    """Pure-JAX bilinear grid_sample(align_corners=True, padding_mode='zeros') reference."""
    N, C, H, W = src.shape
    iy = jnp.arange(H, dtype=jnp.float32)[:, None]
    ix = jnp.arange(W, dtype=jnp.float32)[None, :]
    sy = iy + flow[:, 0]
    sx = ix + flow[:, 1]
    y0 = jnp.floor(sy); y1 = y0 + 1.0
    x0 = jnp.floor(sx); x1 = x0 + 1.0
    wy1 = sy - y0; wy0 = 1.0 - wy1
    wx1 = sx - x0; wx0 = 1.0 - wx1

    bidx = jnp.arange(N)[:, None, None, None]
    cidx = jnp.arange(C)[None, :, None, None]

    def corner(yc, xc, w):
        valid = (yc >= 0) & (yc <= H - 1) & (xc >= 0) & (xc <= W - 1)
        yi = jnp.clip(yc, 0, H - 1).astype(jnp.int32)[:, None]
        xi = jnp.clip(xc, 0, W - 1).astype(jnp.int32)[:, None]
        return src[bidx, cidx, yi, xi] * (w * valid)[:, None]

    return (corner(y0, x0, wy0 * wx0) + corner(y0, x1, wy0 * wx1)
            + corner(y1, x0, wy1 * wx0) + corner(y1, x1, wy1 * wx1))


if __name__ == "__main__":
    key = jax.random.PRNGKey(0)
    k_src, k_flow = jax.random.split(key)

    N, C, H, W = 2, 4, 16, 16
    src = jax.random.normal(k_src, (N, C, H, W), dtype=jnp.float32)
    # small displacement field (in pixels), like a registration flow
    flow = 2.0 * jax.random.normal(k_flow, (N, 2, H, W), dtype=jnp.float32)

    out = spatial_transformer(src, flow)
    jax.block_until_ready(out)
    assert out.shape == (N, C, H, W)

    # correctness vs pure-JAX bilinear grid_sample
    ref = _reference_grid_sample(src, flow)
    assert float(jnp.max(jnp.abs(out - ref))) < 1e-4, float(jnp.max(jnp.abs(out - ref)))

    # zero flow reproduces the source (identity warp)
    out_id = spatial_transformer(src, jnp.zeros((N, 2, H, W), jnp.float32))
    jax.block_until_ready(out_id)
    assert float(jnp.max(jnp.abs(out_id - src))) < 1e-5

    print("KERNEL_OK")
</pallas_src>

<mosaic_0001>
module attributes {stable_mosaic.version = 11 : i64} {
  func.func @_st_kernel(%arg0: i32, %arg1: i32, %arg2: memref<1x64x16xf32, #tpu.memory_space<vmem>>, %arg3: memref<1x2x256xf32, #tpu.memory_space<vmem>>, %arg4: memref<2x256xf32, #tpu.memory_space<vmem>>, %arg5: memref<1x4x256xf32, #tpu.memory_space<vmem>>) attributes {dimension_semantics = [#tpu.dimension_semantics<parallel>, #tpu.dimension_semantics<parallel>], iteration_bounds = array<i64: 2, 1>, scalar_prefetch = 0 : i64, scratch_operands = 0 : i64, tpu.core_type = #tpu.core_type<tc>, window_params = [{transform_indices = @transform_0, window_bounds = array<i64: 1, 64, 16>}, {transform_indices = @transform_1, window_bounds = array<i64: 1, 2, 256>}, {transform_indices = @transform_2, window_bounds = array<i64: 2, 256>}, {transform_indices = @transform_3, window_bounds = array<i64: 1, 4, 256>}]} {
    %c0 = arith.constant 0 : index
    %c0_0 = arith.constant 0 : index
    %c0_1 = arith.constant 0 : index
    %0 = vector.load %arg3[%c0, %c0_0, %c0_1] : memref<1x2x256xf32, #tpu.memory_space<vmem>>, vector<1x2x256xf32>
    %1 = vector.shape_cast %0 : vector<1x2x256xf32> to vector<2x256xf32>
    %c0_2 = arith.constant 0 : index
    %c0_3 = arith.constant 0 : index
    %2 = vector.load %arg4[%c0_2, %c0_3] : memref<2x256xf32, #tpu.memory_space<vmem>>, vector<2x256xf32>
    %3 = vector.extract_strided_slice %2 {offsets = [0, 0], sizes = [1, 256], strides = [1, 1]} : vector<2x256xf32> to vector<1x256xf32>
    %4 = vector.extract_strided_slice %1 {offsets = [0, 0], sizes = [1, 256], strides = [1, 1]} : vector<2x256xf32> to vector<1x256xf32>
    %5 = arith.addf %3, %4 : vector<1x256xf32>
    %6 = vector.extract_strided_slice %2 {offsets = [1, 0], sizes = [1, 256], strides = [1, 1]} : vector<2x256xf32> to vector<1x256xf32>
    %7 = vector.extract_strided_slice %1 {offsets = [1, 0], sizes = [1, 256], strides = [1, 1]} : vector<2x256xf32> to vector<1x256xf32>
    %8 = arith.addf %6, %7 : vector<1x256xf32>
    %9 = math.floor %5 : vector<1x256xf32>
    %cst = arith.constant 1.000000e+00 : f32
    %10 = vector.broadcast %cst : f32 to vector<1x256xf32>
    %11 = arith.addf %9, %10 : vector<1x256xf32>
    %12 = math.floor %8 : vector<1x256xf32>
    %cst_4 = arith.constant 1.000000e+00 : f32
    %13 = vector.broadcast %cst_4 : f32 to vector<1x256xf32>
    %14 = arith.addf %12, %13 : vector<1x256xf32>
    %15 = arith.subf %5, %9 : vector<1x256xf32>
    %cst_5 = arith.constant 1.000000e+00 : f32
    %16 = vector.broadcast %cst_5 : f32 to vector<1x256xf32>
    %17 = arith.subf %16, %15 : vector<1x256xf32>
    %18 = arith.subf %8, %12 : vector<1x256xf32>
    %cst_6 = arith.constant 1.000000e+00 : f32
    %19 = vector.broadcast %cst_6 : f32 to vector<1x256xf32>
    %20 = arith.subf %19, %18 : vector<1x256xf32>
    %cst_7 = arith.constant 0.000000e+00 : f32
    %21 = vector.broadcast %cst_7 : f32 to vector<1x256xf32>
    %22 = arith.cmpf oge, %9, %21 : vector<1x256xf32>
    %cst_8 = arith.constant 1.500000e+01 : f32
    %23 = vector.broadcast %cst_8 : f32 to vector<1x256xf32>
    %24 = arith.cmpf ole, %9, %23 : vector<1x256xf32>
    %25 = arith.andi %22, %24 : vector<1x256xi1>
    %26 = arith.extui %25 : vector<1x256xi1> to vector<1x256xi32>
    %27 = arith.sitofp %26 : vector<1x256xi32> to vector<1x256xf32>
    %28 = arith.mulf %17, %27 : vector<1x256xf32>
    %cst_9 = arith.constant 0.000000e+00 : f32
    %29 = vector.broadcast %cst_9 : f32 to vector<1x256xf32>
    %30 = arith.cmpf oge, %11, %29 : vector<1x256xf32>
    %cst_10 = arith.constant 1.500000e+01 : f32
    %31 = vector.broadcast %cst_10 : f32 to vector<1x256xf32>
    %32 = arith.cmpf ole, %11, %31 : vector<1x256xf32>
    %33 = arith.andi %30, %32 : vector<1x256xi1>
    %34 = arith.extui %33 : vector<1x256xi1> to vector<1x256xi32>
    %35 = arith.sitofp %34 : vector<1x256xi32> to vector<1x256xf32>
    %36 = arith.mulf %15, %35 : vector<1x256xf32>
    %cst_11 = arith.constant 0.000000e+00 : f32
    %37 = vector.broadcast %cst_11 : f32 to vector<1x256xf32>
    %38 = arith.cmpf oge, %12, %37 : vector<1x256xf32>
    %cst_12 = arith.constant 1.500000e+01 : f32
    %39 = vector.broadcast %cst_12 : f32 to vector<1x256xf32>
    %40 = arith.cmpf ole, %12, %39 : vector<1x256xf32>
    %41 = arith.andi %38, %40 : vector<1x256xi1>
    %42 = arith.extui %41 : vector<1x256xi1> to vector<1x256xi32>
    %43 = arith.sitofp %42 : vector<1x256xi32> to vector<1x256xf32>
    %44 = arith.mulf %20, %43 : vector<1x256xf32>
    %cst_13 = arith.constant 0.000000e+00 : f32
    %45 = vector.broadcast %cst_13 : f32 to vector<1x256xf32>
    %46 = arith.cmpf oge, %14, %45 : vector<1x256xf32>
    %cst_14 = arith.constant 1.500000e+01 : f32
    %47 = vector.broadcast %cst_14 : f32 to vector<1x256xf32>
    %48 = arith.cmpf ole, %14, %47 : vector<1x256xf32>
    %49 = arith.andi %46, %48 : vector<1x256xi1>
    %50 = arith.extui %49 : vector<1x256xi1> to vector<1x256xi32>
    %51 = arith.sitofp %50 : vector<1x256xi32> to vector<1x256xf32>
    %52 = arith.mulf %18, %51 : vector<1x256xf32>
    %cst_15 = arith.constant 0.000000e+00 : f32
    %cst_16 = arith.constant 1.500000e+01 : f32
    %53 = vector.broadcast %cst_15 : f32 to vector<1x256xf32>
    %54 = arith.maximumf %53, %12 : vector<1x256xf32>
    %55 = vector.broadcast %cst_16 : f32 to vector<1x256xf32>
    %56 = arith.minimumf %55, %54 : vector<1x256xf32>
    %57 = arith.fptosi %56 : vector<1x256xf32> to vector<1x256xi32>
    %cst_17 = arith.constant 0.000000e+00 : f32
    %cst_18 = arith.constant 1.500000e+01 : f32
    %58 = vector.broadcast %cst_17 : f32 to vector<1x256xf32>
    %59 = arith.maximumf %58, %14 : vector<1x256xf32>
    %60 = vector.broadcast %cst_18 : f32 to vector<1x256xf32>
    %61 = arith.minimumf %60, %59 : vector<1x256xf32>
    %62 = arith.fptosi %61 : vector<1x256xf32> to vector<1x256xi32>
    %cst_19 = arith.constant 0.000000e+00 : f32
    %cst_20 = arith.constant 1.500000e+01 : f32
    %63 = vector.broadcast %cst_19 : f32 to vector<1x256xf32>
    %64 = arith.maximumf %63, %9 : vector<1x256xf32>
    %65 = vector.broadcast %cst_20 : f32 to vector<1x256xf32>
    %66 = arith.minimumf %65, %64 : vector<1x256xf32>
    %67 = arith.fptosi %66 : vector<1x256xf32> to vector<1x256xi32>
    %cst_21 = arith.constant 0.000000e+00 : f32
    %cst_22 = arith.constant 1.500000e+01 : f32
    %68 = vector.broadcast %cst_21 : f32 to vector<1x256xf32>
    %69 = arith.maximumf %68, %11 : vector<1x256xf32>
    %70 = vector.broadcast %cst_22 : f32 to vector<1x256xf32>
    %71 = arith.minimumf %70, %69 : vector<1x256xf32>
    %72 = arith.fptosi %71 : vector<1x256xf32> to vector<1x256xi32>
    %73 = tpu.iota {dimensions = array<i32: 0>} : vector<16x256xi32>
    %74 = vector.broadcast %57 : vector<1x256xi32> to vector<16x256xi32>
    %75 = arith.cmpi eq, %73, %74 : vector<16x256xi32>
    %76 = arith.extui %75 : vector<16x256xi1> to vector<16x256xi32>
    %77 = arith.sitofp %76 : vector<16x256xi32> to vector<16x256xf32>
    %78 = vector.broadcast %44 : vector<1x256xf32> to vector<16x256xf32>
    %79 = arith.mulf %77, %78 : vector<16x256xf32>
    %80 = vector.broadcast %62 : vector<1x256xi32> to vector<16x256xi32>
    %81 = arith.cmpi eq, %73, %80 : vector<16x256xi32>
    %82 = arith.extui %81 : vector<16x256xi1> to vector<16x256xi32>
    %83 = arith.sitofp %82 : vector<16x256xi32> to vector<16x256xf32>
    %84 = vector.broadcast %52 : vector<1x256xf32> to vector<16x256xf32>
    %85 = arith.mulf %83, %84 : vector<16x256xf32>
    %86 = arith.addf %79, %85 : vector<16x256xf32>
    %87 = tpu.iota {dimensions = array<i32: 0>} : vector<16x256xi32>
    %88 = vector.broadcast %67 : vector<1x256xi32> to vector<16x256xi32>
    %89 = arith.cmpi eq, %87, %88 : vector<16x256xi32>
    %90 = arith.extui %89 : vector<16x256xi1> to vector<16x256xi32>
    %91 = arith.sitofp %90 : vector<16x256xi32> to vector<16x256xf32>
    %92 = vector.broadcast %28 : vector<1x256xf32> to vector<16x256xf32>
    %93 = arith.mulf %91, %92 : vector<16x256xf32>
    %94 = vector.broadcast %72 : vector<1x256xi32> to vector<16x256xi32>
    %95 = arith.cmpi eq, %87, %94 : vector<16x256xi32>
    %96 = arith.extui %95 : vector<16x256xi1> to vector<16x256xi32>
    %97 = arith.sitofp %96 : vector<16x256xi32> to vector<16x256xf32>
    %98 = vector.broadcast %36 : vector<1x256xf32> to vector<16x256xf32>
    %99 = arith.mulf %97, %98 : vector<16x256xf32>
    %100 = arith.addf %93, %99 : vector<16x256xf32>
    %c0_23 = arith.constant 0 : index
    %c0_24 = arith.constant 0 : index
    %c0_25 = arith.constant 0 : index
    %101 = vector.load %arg2[%c0_23, %c0_24, %c0_25] : memref<1x64x16xf32, #tpu.memory_space<vmem>>, vector<1x64x16xf32>
    %102 = vector.shape_cast %101 : vector<1x64x16xf32> to vector<64x16xf32>
    %cst_26 = arith.constant dense<0.000000e+00> : vector<64x256xf32>
    %103 = tpu.matmul %102, %86, %cst_26 {dimension_numbers = #tpu.dot_dimension_numbers<[1], [0], [0], [1], [0, 0, 1, 1], [], []>} : vector<64x16xf32>, vector<16x256xf32>, vector<64x256xf32> -> vector<64x256xf32>
    %104 = vector.shape_cast %103 : vector<64x256xf32> to vector<4x16x256xf32>
    %105 = vector.shape_cast %100 : vector<16x256xf32> to vector<1x16x256xf32>
    %106 = vector.broadcast %105 : vector<1x16x256xf32> to vector<4x16x256xf32>
    %107 = arith.mulf %104, %106 : vector<4x16x256xf32>
    %cst_27 = arith.constant dense<0.000000e+00> : vector<4x256xf32>
    %108 = vector.multi_reduction <add>, %107, %cst_27 [1] : vector<4x16x256xf32> to vector<4x256xf32>
    %c0_28 = arith.constant 0 : index
    %c0_29 = arith.constant 0 : index
    %c0_30 = arith.constant 0 : index
    %109 = vector.load %arg5[%c0_28, %c0_29, %c0_30] : memref<1x4x256xf32, #tpu.memory_space<vmem>>, vector<1x4x256xf32>
    %110 = vector.shape_cast %109 : vector<1x4x256xf32> to vector<4x256xf32>
    %111 = vector.shape_cast %108 : vector<4x256xf32> to vector<1x4x256xf32>
    tpu.vector_store %arg5[%c0_28, %c0_29, %c0_30], %111 {strides = array<i32>} : memref<1x4x256xf32, #tpu.memory_space<vmem>>, vector<1x4x256xf32>,
    return
  }
  func.func @transform_0(%arg0: i32, %arg1: i32) -> (i32, i32, i32) {
    %c0_i32 = arith.constant 0 : i32
    %c0_i32_0 = arith.constant 0 : i32
    %c0_i32_1 = arith.constant 0 : i32
    return %arg0, %c0_i32, %c0_i32_0 : i32, i32, i32
  }
  func.func @transform_1(%arg0: i32, %arg1: i32) -> (i32, i32, i32) {
    %c0_i32 = arith.constant 0 : i32
    %c0_i32_0 = arith.constant 0 : i32
    return %arg0, %c0_i32, %arg1 : i32, i32, i32
  }
  func.func @transform_2(%arg0: i32, %arg1: i32) -> (i32, i32) {
    %c0_i32 = arith.constant 0 : i32
    %c0_i32_0 = arith.constant 0 : i32
    return %c0_i32, %arg1 : i32, i32
  }
  func.func @transform_3(%arg0: i32, %arg1: i32) -> (i32, i32, i32) {
    %c0_i32 = arith.constant 0 : i32
    %c0_i32_0 = arith.constant 0 : i32
    return %arg0, %c0_i32, %arg1 : i32, i32, i32
  }
}

</mosaic_0001>

<llo_original>
// kernel: tpu_custom_call.1
$region0: #{tpu_custom_call.1}
  #allocation0 [shape = 'u32[]', space=smem, size = 0x4, offset = 0x4, fixed_abs, tag = 'smem constant byte address 0x4 - core index']
  #allocation1 [shape = 'u32[144,128]{1,0:T(1,128)}', space=vmem, size = 0x12000, scoped, tag = 'internal scratch']
  %s0 = inlined_call_operand.vmem [shape: f32[2,64,16], index: 0, kind: input, shape index: {}]
  %s1 = inlined_call_operand.vmem [shape: f32[2,2,256], index: 1, kind: input, shape index: {}]
  %s2 = inlined_call_operand.vmem [shape: f32[2,256], index: 2, kind: input, shape index: {}]
  %s3 = inlined_call_operand.hbm [shape: f32[2,4,256], index: 3, kind: output, shape index: {}]
  %s4 = sld [smem:[#allocation0]]
  $region45: #{tpu_custom_call.1} parent=0
    _
  %s6 = ssub.s32 1, %s4
  %s7 = scalar_select 0, %s6, %s4
  $region1: #{tpu_custom_call.1} parent=0
    #allocation2 [shape = 'u8[8192]{0}', space=vmem, size = 0x2000, scoped, tag = 'output window, operand 0']
    #allocation3 [shape = 's32[2]{0}', space=sflag, size = 0x8, scoped, tag = 'scoped memory for tpu_custom_call.1']
    %8 = vsyncpa [#allocation3], 0
    %s9 = scalar_lea.sflag [#allocation3], 1
    %10 = vsyncpa %s9, 0
    loop: start=0, step=1, limit=4
    $region2: #{tpu_custom_call.1} parent=1 // loop_pre_header
      _
    $region3: #{tpu_custom_call.1} parent=1 // loop_header
      %s12 = sphi 0, %s16
      %p13 = scmp.ge.s32.totalorder %s12, 4
      %s19 = sphi 0, %s31
      %s20 = sphi 0, %s27
      %s21 = sphi 0, %s19
      %s22 = sphi 0, %s20
      %s23 = sphi 0, %s21
      %s24 = sphi 0, %s22
      %s34 = sphi 0, %s36
      %s37 = sphi 0, %s34
      %s38 = sphi 0, %s37
      %s54 = sphi 0, %s38
      %s62 = sphi 0, %s64
      %s65 = sphi 0, %s62
      %s66 = sphi 0, %s65
      %s82 = sphi 0, %s66
      %s88 = sphi 0, %s90
      %s91 = sphi 0, %s88
      %s92 = sphi 0, %s91
      %s108 = sphi 0, %s92
      %s116 = sphi 0, %s118
      %s119 = sphi 0, %s116
      %s120 = sphi 0, %s119
      %s136 = sphi 0, %s120
    $region4: #{tpu_custom_call.1} parent=1 // loop_header_branch
      %15 = sbr.rel (%p13) target = $region8
    $region5: #{tpu_custom_call.1} parent=1 // loop_body
      %s17 = ssub.s32 %s12, 1
      %s18 = ssub.s32 %s12, 2
      %s25 = sadd.s32 1, %s20
      %p26 = scmp.ge.s32.totalorder %s25, 1
      %s27 = scalar_select %p26, 0, %s25
      %s28 = sadd.s32 1, %s19
      %s29 = scalar_select %p26, %s28, %s19
      %p30 = scmp.ge.s32.totalorder %s29, 2
      %s31 = scalar_select %p30, 0, %s29
      %s32 = ssub.s32 %s19, %s31
      %p33 = scmp.eq.s32.totalorder %s32, 0
      %s35 = sadd.s32 %s34, 1
      %s36 = scalar_select %p33, %s34, %s35
      %p39 = pneg %p33
      %p40 = scmp.eq.s32.totalorder %s12, 1
      %p41 = por %p39, %p40
      %p42 = scmp.ne.s32.totalorder %s34, %s37
      %p43 = scmp.eq.s32.totalorder %s12, 0
      %p44 = por %p42, %p43
      %p45 = scmp.ne.s32.totalorder %s34, %s37
      %p46 = scmp.eq.s32.totalorder %s17, 1
      %p47 = por %p45, %p46
      %p48 = scmp.ne.s32.totalorder %s37, %s38
      %p49 = scmp.eq.s32.totalorder %s17, 0
      %p50 = por %p48, %p49
      %p51 = scmp.ne.s32.totalorder %s37, %s38
      %p52 = scmp.eq.s32.totalorder %s18, 1
      %p53 = por %p51, %p52
      %p55 = scmp.ne.s32.totalorder %s38, %s54
      %p56 = scmp.eq.s32.totalorder %s18, 0
      %p57 = por %p55, %p56
      %s58 = ssub.s32 %s19, %s31
      %s59 = ssub.s32 %s20, %s27
      %s60 = sor.u32 %s58, %s59
      %p61 = scmp.eq.s32.totalorder %s60, 0
      %s63 = sadd.s32 %s62, 1
      %s64 = scalar_select %p61, %s62, %s63
      %p67 = pneg %p61
      %p68 = scmp.eq.s32.totalorder %s12, 1
      %p69 = por %p67, %p68
      %p70 = scmp.ne.s32.totalorder %s62, %s65
      %p71 = scmp.eq.s32.totalorder %s12, 0
      %p72 = por %p70, %p71
      %p73 = scmp.ne.s32.totalorder %s62, %s65
      %p74 = scmp.eq.s32.totalorder %s17, 1
      %p75 = por %p73, %p74
      %p76 = scmp.ne.s32.totalorder %s65, %s66
      %p77 = scmp.eq.s32.totalorder %s17, 0
      %p78 = por %p76, %p77
      %p79 = scmp.ne.s32.totalorder %s65, %s66
      %p80 = scmp.eq.s32.totalorder %s18, 1
      %p81 = por %p79, %p80
      %p83 = scmp.ne.s32.totalorder %s66, %s82
      %p84 = scmp.eq.s32.totalorder %s18, 0
      %p85 = por %p83, %p84
      %s86 = ssub.s32 %s20, %s27
      %p87 = scmp.eq.s32.totalorder %s86, 0
      %s89 = sadd.s32 %s88, 1
      %s90 = scalar_select %p87, %s88, %s89
      %p93 = pneg %p87
      %p94 = scmp.eq.s32.totalorder %s12, 1
      %p95 = por %p93, %p94
      %p96 = scmp.ne.s32.totalorder %s88, %s91
      %p97 = scmp.eq.s32.totalorder %s12, 0
      %p98 = por %p96, %p97
      %p99 = scmp.ne.s32.totalorder %s88, %s91
      %p100 = scmp.eq.s32.totalorder %s17, 1
      %p101 = por %p99, %p100
      %p102 = scmp.ne.s32.totalorder %s91, %s92
      %p103 = scmp.eq.s32.totalorder %s17, 0
      %p104 = por %p102, %p103
      %p105 = scmp.ne.s32.totalorder %s91, %s92
      %p106 = scmp.eq.s32.totalorder %s18, 1
      %p107 = por %p105, %p106
      %p109 = scmp.ne.s32.totalorder %s92, %s108
      %p110 = scmp.eq.s32.totalorder %s18, 0
      %p111 = por %p109, %p110
      %s112 = ssub.s32 %s19, %s31
      %s113 = ssub.s32 %s20, %s27
      %s114 = sor.u32 %s112, %s113
      %p115 = scmp.eq.s32.totalorder %s114, 0
      %s117 = sadd.s32 %s116, 1
      %s118 = scalar_select %p115, %s116, %s117
      %p121 = pneg %p115
      %p122 = scmp.eq.s32.totalorder %s12, 1
      %p123 = por %p121, %p122
      %p124 = scmp.ne.s32.totalorder %s116, %s119
      %p125 = scmp.eq.s32.totalorder %s12, 0
      %p126 = por %p124, %p125
      %p127 = scmp.ne.s32.totalorder %s116, %s119
      %p128 = scmp.eq.s32.totalorder %s17, 1
      %p129 = por %p127, %p128
      %p130 = scmp.ne.s32.totalorder %s119, %s120
      %p131 = scmp.eq.s32.totalorder %s17, 0
      %p132 = por %p130, %p131
      %p133 = scmp.ne.s32.totalorder %s119, %s120
      %p134 = scmp.eq.s32.totalorder %s18, 1
      %p135 = por %p133, %p134
      %p137 = scmp.ne.s32.totalorder %s120, %s136
      %p138 = scmp.eq.s32.totalorder %s18, 0
      %p139 = por %p137, %p138
      %p140 = scmp.le.s32.totalorder 1, %s12
      %p141 = scmp.lt.s32.totalorder %s12, 3
      %p142 = pnand %p140, %p141
      %p143 = pneg %p142
      // Predicated region
      $region9: #{tpu_custom_call.1} parent=5 // pred_check
        _
      $region10: #{tpu_custom_call.1} parent=5 // pred_check_branch
        %145 = sbr.rel (%p142) target = $region12
      $region11: #{tpu_custom_call.1} parent=5 // pred_region
        %s146 = ssub.s32 %s12, 1
        // Predicated region
        $region13: #{tpu_custom_call.1} parent=11 // pred_check
          %p147 = pneg %p104
        $region14: #{tpu_custom_call.1} parent=11 // pred_check_branch
          %149 = sbr.rel (%p147) target = $region16
        $region15: #{tpu_custom_call.1} parent=11 // pred_region
          %s150 = smul.u32 2, %s22
          %p151 = scmp.lt.s32.totalorder %s150, 1
          %s152 = scalar_select %p151, %s150, 1
          %s153 = smul.addr %s152, 2
          %s154 = scalar_lea.vmem %s2, %s153
          %s155 = smul.u32 2, %s22
        $region16: #{tpu_custom_call.1} parent=11 // pred_fallthru
          _
      $region12: #{tpu_custom_call.1} parent=5 // pred_fallthru
        _
      %p156 = scmp.lt.s32.totalorder %s12, 2
      // Predicated region
      $region17: #{tpu_custom_call.1} parent=5 // pred_check
        %p157 = pneg %p156
      $region18: #{tpu_custom_call.1} parent=5 // pred_check_branch
        %159 = sbr.rel (%p157) target = $region20
      $region19: #{tpu_custom_call.1} parent=5 // pred_region
        // Predicated region
        $region21: #{tpu_custom_call.1} parent=19 // pred_check
          %p160 = pneg %p44
        $region22: #{tpu_custom_call.1} parent=19 // pred_check_branch
          %162 = sbr.rel (%p160) target = $region24
        $region23: #{tpu_custom_call.1} parent=19 // pred_region
          %p163 = scmp.lt.s32.totalorder %s19, 1
          %s164 = scalar_select %p163, %s19, 1
          %s165 = smul.addr %s164, 8
          %s166 = smul.addr %s165, 8
          %s167 = scalar_lea.vmem %s0, %s166
        $region24: #{tpu_custom_call.1} parent=19 // pred_fallthru
          _
        // Predicated region
        $region25: #{tpu_custom_call.1} parent=19 // pred_check
          %p168 = pneg %p72
        $region26: #{tpu_custom_call.1} parent=19 // pred_check_branch
          %170 = sbr.rel (%p168) target = $region28
        $region27: #{tpu_custom_call.1} parent=19 // pred_region
          %s171 = smul.u32 2, %s20
          %p172 = scmp.lt.s32.totalorder %s19, 1
          %s173 = scalar_select %p172, %s19, 1
          %p174 = scmp.lt.s32.totalorder %s171, 1
          %s175 = scalar_select %p174, %s171, 1
          %s176 = smul.addr %s173, 2
          %s177 = sadd.s32 %s175, %s176
          %s178 = smul.addr %s177, 2
          %s179 = scalar_lea.vmem %s1, %s178
          %s180 = smul.u32 2, %s20
        $region28: #{tpu_custom_call.1} parent=19 // pred_fallthru
          _
      $region20: #{tpu_custom_call.1} parent=5 // pred_fallthru
        _
      %p181 = scmp.le.s32.totalorder 1, %s12
      %p182 = scmp.lt.s32.totalorder %s12, 3
      %p183 = pnand %p181, %p182
      %p184 = pneg %p183
      // Predicated region
      $region29: #{tpu_custom_call.1} parent=5 // pred_check
        _
      $region30: #{tpu_custom_call.1} parent=5 // pred_check_branch
        %186 = sbr.rel (%p183) target = $region32
      $region31: #{tpu_custom_call.1} parent=5 // pred_region
        %s187 = ssub.s32 %s12, 1
        %p188 = scmp.lt.s32.totalorder %s21, 1
        %s189 = scalar_select %p188, %s21, 1
        %s190 = smul.addr %s189, 8
        %s191 = smul.addr %s190, 8
        %s192 = scalar_lea.vmem %s0, %s191
        %p193 = pneg %p50
        %p194 = pneg %p47
        %s195 = smul.u32 2, %s22
        %p196 = scmp.lt.s32.totalorder %s21, 1
        %s197 = scalar_select %p196, %s21, 1
        %p198 = scmp.lt.s32.totalorder %s195, 1
        %s199 = scalar_select %p198, %s195, 1
        %s200 = smul.addr %s197, 2
        %s201 = sadd.s32 %s199, %s200
        %s202 = smul.addr %s201, 2
        %s203 = scalar_lea.vmem %s1, %s202
        %p204 = pneg %p78
        %p205 = pneg %p75
        %s206 = smul.u32 2, %s22
        %p207 = scmp.lt.s32.totalorder %s206, 1
        %s208 = scalar_select %p207, %s206, 1
        %s209 = smul.addr %s208, 2
        %s210 = scalar_lea.vmem %s2, %s209
        %p211 = pneg %p104
        %p212 = pneg %p101
        %p213 = pneg %p132
        %p214 = pneg %p129
        %s215 = sand.u32 %s119, 1
        %s216 = scalar_lea.sflag [#allocation3], %s215
        %s217 = sand.u32 %s119, 1
        %s218 = smul.addr %s217, 8
        %s219 = scalar_lea.vmem [#allocation2], %s218
        %p220 = scmp.lt.s32.totalorder %s21, 1
        %s221 = scalar_select %p220, %s21, 1
        %s222 = smul.addr %s221, 8
        %s223 = smul.addr %s222, 8
        %s224 = scalar_lea.vmem %s0, %s223
        %s225 = smul.u32 2, %s22
        %p226 = scmp.lt.s32.totalorder %s21, 1
        %s227 = scalar_select %p226, %s21, 1
        %p228 = scmp.lt.s32.totalorder %s225, 1
        %s229 = scalar_select %p228, %s225, 1
        %s230 = smul.addr %s227, 2
        %s231 = sadd.s32 %s229, %s230
        %s232 = smul.addr %s231, 2
        %s233 = scalar_lea.vmem %s1, %s232
        %s234 = smul.u32 2, %s22
        %s235 = smul.u32 2, %s22
        %p236 = scmp.lt.s32.totalorder %s235, 1
        %s237 = scalar_select %p236, %s235, 1
        %s238 = smul.addr %s237, 2
        %s239 = scalar_lea.vmem %s2, %s238
        %s240 = smul.u32 2, %s22
        %s241 = smul.u32 2, %s22
        %v242 = vld [vmem:[%s233] sm:$0xf]
        %v243 = vld [vmem:[%s239] sm:$0xf]
        %v244 = vadd.f32 %v243, %v242
        %v245 = vfloor.f32 %v244
        %v246 = vadd.f32 %v245, 1.0
        %v247 = vsub.f32 %v244, %v245
        %v248 = vsub.f32 1.0, %v247
        %vm249 = vcmp.ge.f32.partialorder %v245, 0.0
        %vm250 = vcmp.le.f32.partialorder %v245, 15.0
        %vm251 = vmand %vm249, %vm250
        %v252 = vsel %vm251, 1, 0
        %v253 = vcvt.s32.f32 %v252
        %v254 = vmul.f32 %v248, %v253
        %vm255 = vcmp.ge.f32.partialorder %v246, 0.0
        %vm256 = vcmp.le.f32.partialorder %v246, 15.0
        %vm257 = vmand %vm255, %vm256
        %v258 = vsel %vm257, 1, 0
        %v259 = vcvt.s32.f32 %v258
        %v260 = vmul.f32 %v247, %v259
        %v261 = vmax.f32 %v245, 0.0
        %v262 = vmin.f32 %v261, 15.0
        %v263 = vcvt.f32.s32.to.zero.pseudo %v262
        %v264 = vmax.f32 %v246, 0.0
        %v265 = vmin.f32 %v264, 15.0
        %v266 = vcvt.f32.s32.to.zero.pseudo %v265
        %v267 = vlaneseq
        %v268 = vshrl.u32 %v267, 7
        %v269 = vadd.s32 %v268, 8
        %v270 = vlaneseq
        %v271 = vshrl.u32 %v270, 7
        %v272 = vsub.s32 1, %v271
        %v273 = vrot.slane %v263, %v272
        %v274 = vlaneseq
        %v275 = vshrl.u32 %v274, 7
        %v276 = vsub.s32 3, %v275
        %v277 = vrot.slane %v263, %v276
        %v278 = vlaneseq
        %v279 = vshrl.u32 %v278, 7
        %v280 = vsub.s32 1, %v279
        %v281 = vrot.slane %v273, %v280
        %v282 = vlaneseq
        %v283 = vshrl.u32 %v282, 7
        %v284 = vsub.s32 1, %v283
        %v285 = vrot.slane %v277, %v284
        %vm286 = vcmp.eq.s32.totalorder %v268, %v281
        %vm287 = vcmp.eq.s32.totalorder %v268, %v285
        %vm288 = vcmp.eq.s32.totalorder %v269, %v281
        %vm289 = vcmp.eq.s32.totalorder %v269, %v285
        %v290 = vsel %vm286, 1, 0
        %v291 = vsel %vm287, 1, 0
        %v292 = vsel %vm288, 1, 0
        %v293 = vsel %vm289, 1, 0
        %v294 = vcvt.s32.f32 %v290
        %v295 = vcvt.s32.f32 %v291
        %v296 = vcvt.s32.f32 %v292
        %v297 = vcvt.s32.f32 %v293
        %v299 = vlaneseq
        %v300 = vshrl.u32 %v299, 7
        %v301 = vsub.s32 1, %v300
        %v302 = vrot.slane %v254, %v301
        %v303 = vlaneseq
        %v304 = vshrl.u32 %v303, 7
        %v305 = vsub.s32 3, %v304
        %v306 = vrot.slane %v254, %v305
        %v309 = vlaneseq
        %v310 = vshrl.u32 %v309, 7
        %v311 = vsub.s32 1, %v310
        %v312 = vrot.slane %v302, %v311
        %v313 = vlaneseq
        %v314 = vshrl.u32 %v313, 7
        %v315 = vsub.s32 1, %v314
        %v316 = vrot.slane %v306, %v315
        %v317 = vmul.f32 %v294, %v312
        %v318 = vmul.f32 %v295, %v316
        %v319 = vmul.f32 %v296, %v312
        %v320 = vmul.f32 %v297, %v316
        %v321 = vlaneseq
        %v322 = vshrl.u32 %v321, 7
        %v323 = vsub.s32 1, %v322
        %v324 = vrot.slane %v266, %v323
        %v325 = vlaneseq
        %v326 = vshrl.u32 %v325, 7
        %v327 = vsub.s32 3, %v326
        %v328 = vrot.slane %v266, %v327
        %v329 = vlaneseq
        %v330 = vshrl.u32 %v329, 7
        %v331 = vsub.s32 1, %v330
        %v332 = vrot.slane %v324, %v331
        %v333 = vlaneseq
        %v334 = vshrl.u32 %v333, 7
        %v335 = vsub.s32 1, %v334
        %v336 = vrot.slane %v328, %v335
        %vm337 = vcmp.eq.s32.totalorder %v268, %v332
        %vm338 = vcmp.eq.s32.totalorder %v268, %v336
        %vm339 = vcmp.eq.s32.totalorder %v269, %v332
        %vm340 = vcmp.eq.s32.totalorder %v269, %v336
        %v341 = vsel %vm337, 1, 0
        %v342 = vsel %vm338, 1, 0
        %v343 = vsel %vm339, 1, 0
        %v344 = vsel %vm340, 1, 0
        %v345 = vcvt.s32.f32 %v341
        %v346 = vcvt.s32.f32 %v342
        %v347 = vcvt.s32.f32 %v343
        %v348 = vcvt.s32.f32 %v344
        %v350 = vlaneseq
        %v351 = vshrl.u32 %v350, 7
        %v352 = vsub.s32 1, %v351
        %v353 = vrot.slane %v260, %v352
        %v354 = vlaneseq
        %v355 = vshrl.u32 %v354, 7
        %v356 = vsub.s32 3, %v355
        %v357 = vrot.slane %v260, %v356
        %v360 = vlaneseq
        %v361 = vshrl.u32 %v360, 7
        %v362 = vsub.s32 1, %v361
        %v363 = vrot.slane %v353, %v362
        %v364 = vlaneseq
        %v365 = vshrl.u32 %v364, 7
        %v366 = vsub.s32 1, %v365
        %v367 = vrot.slane %v357, %v366
        %v368 = vmul.f32 %v345, %v363
        %v369 = vmul.f32 %v346, %v367
        %v370 = vmul.f32 %v347, %v363
        %v371 = vmul.f32 %v348, %v367
        %v372 = vadd.f32 %v317, %v368
        %v373 = vadd.f32 %v318, %v369
        %v374 = vadd.f32 %v319, %v370
        %v375 = vadd.f32 %v320, %v371
        %v376 = vlaneseq
        %v377 = vshrl.u32 %v376, 7
        %v378 = vsub.s32 0, %v377
        %v379 = vrot.slane %v263, %v378
        %v380 = vlaneseq
        %v381 = vshrl.u32 %v380, 7
        %v382 = vsub.s32 2, %v381
        %v383 = vrot.slane %v263, %v382
        %v384 = vlaneseq
        %v385 = vshrl.u32 %v384, 7
        %v386 = vsub.s32 0, %v385
        %v387 = vrot.slane %v379, %v386
        %v388 = vlaneseq
        %v389 = vshrl.u32 %v388, 7
        %v390 = vsub.s32 0, %v389
        %v391 = vrot.slane %v383, %v390
        %vm392 = vcmp.eq.s32.totalorder %v268, %v387
        %vm393 = vcmp.eq.s32.totalorder %v268, %v391
        %vm394 = vcmp.eq.s32.totalorder %v269, %v387
        %vm395 = vcmp.eq.s32.totalorder %v269, %v391
        %v396 = vsel %vm392, 1, 0
        %v397 = vsel %vm393, 1, 0
        %v398 = vsel %vm394, 1, 0
        %v399 = vsel %vm395, 1, 0
        %v400 = vcvt.s32.f32 %v396
        %v401 = vcvt.s32.f32 %v397
        %v402 = vcvt.s32.f32 %v398
        %v403 = vcvt.s32.f32 %v399
        %v404 = vlaneseq
        %v405 = vshrl.u32 %v404, 7
        %v406 = vsub.s32 0, %v405
        %v407 = vrot.slane %v254, %v406
        %v408 = vlaneseq
        %v409 = vshrl.u32 %v408, 7
        %v410 = vsub.s32 2, %v409
        %v411 = vrot.slane %v254, %v410
        %v414 = vlaneseq
        %v415 = vshrl.u32 %v414, 7
        %v416 = vsub.s32 0, %v415
        %v417 = vrot.slane %v407, %v416
        %v418 = vlaneseq
        %v419 = vshrl.u32 %v418, 7
        %v420 = vsub.s32 0, %v419
        %v421 = vrot.slane %v411, %v420
        %v422 = vmul.f32 %v400, %v417
        %v423 = vmul.f32 %v401, %v421
        %v424 = vmul.f32 %v402, %v417
        %v425 = vmul.f32 %v403, %v421
        %v426 = vlaneseq
        %v427 = vshrl.u32 %v426, 7
        %v428 = vsub.s32 0, %v427
        %v429 = vrot.slane %v266, %v428
        %v430 = vlaneseq
        %v431 = vshrl.u32 %v430, 7
        %v432 = vsub.s32 2, %v431
        %v433 = vrot.slane %v266, %v432
        %v434 = vlaneseq
        %v435 = vshrl.u32 %v434, 7
        %v436 = vsub.s32 0, %v435
        %v437 = vrot.slane %v429, %v436
        %v438 = vlaneseq
        %v439 = vshrl.u32 %v438, 7
        %v440 = vsub.s32 0, %v439
        %v441 = vrot.slane %v433, %v440
        %vm442 = vcmp.eq.s32.totalorder %v268, %v437
        %vm443 = vcmp.eq.s32.totalorder %v268, %v441
        %vm444 = vcmp.eq.s32.totalorder %v269, %v437
        %vm445 = vcmp.eq.s32.totalorder %v269, %v441
        %v446 = vsel %vm442, 1, 0
        %v447 = vsel %vm443, 1, 0
        %v448 = vsel %vm444, 1, 0
        %v449 = vsel %vm445, 1, 0
        %v450 = vcvt.s32.f32 %v446
        %v451 = vcvt.s32.f32 %v447
        %v452 = vcvt.s32.f32 %v448
        %v453 = vcvt.s32.f32 %v449
        %v454 = vlaneseq
        %v455 = vshrl.u32 %v454, 7
        %v456 = vsub.s32 0, %v455
        %v457 = vrot.slane %v260, %v456
        %v458 = vlaneseq
        %v459 = vshrl.u32 %v458, 7
        %v460 = vsub.s32 2, %v459
        %v461 = vrot.slane %v260, %v460
        %v464 = vlaneseq
        %v465 = vshrl.u32 %v464, 7
        %v466 = vsub.s32 0, %v465
        %v467 = vrot.slane %v457, %v466
        %v468 = vlaneseq
        %v469 = vshrl.u32 %v468, 7
        %v470 = vsub.s32 0, %v469
        %v471 = vrot.slane %v461, %v470
        %v472 = vmul.f32 %v450, %v467
        %v473 = vmul.f32 %v451, %v471
        %v474 = vmul.f32 %v452, %v467
        %v475 = vmul.f32 %v453, %v471
        %v476 = vadd.f32 %v422, %v472
        %v477 = vadd.f32 %v423, %v473
        %v478 = vadd.f32 %v424, %v474
        %v479 = vadd.f32 %v425, %v475
        %v480 = vld [vmem:[%s224] sm:$0xff]
        %v481 = vld [vmem:[%s224 + $0x8] sm:$0xff]
        %v482 = vld [vmem:[%s224 + $0x10] sm:$0xff]
        %v483 = vld [vmem:[%s224 + $0x18] sm:$0xff]
        %v484 = vld [vmem:[%s224 + $0x20] sm:$0xff]
        %v485 = vld [vmem:[%s224 + $0x28] sm:$0xff]
        %v486 = vld [vmem:[%s224 + $0x30] sm:$0xff]
        %v487 = vld [vmem:[%s224 + $0x38] sm:$0xff]
        %vm488 = vcmask 130048
        %v490 = vsel %vm488, %v480, 0
        %v493 = vsel %vm488, %v481, 0
        %v496 = vsel %vm488, %v482, 0
        %v499 = vsel %vm488, %v483, 0
        %v502 = vsel %vm488, %v484, 0
        %v505 = vsel %vm488, %v485, 0
        %v508 = vsel %vm488, %v486, 0
        %v511 = vsel %vm488, %v487, 0
        %513 = vmatprep.subr.mxu0 %v373
        %514 = vmatpush1.msra.mxu0 %v372
        %515 = vmatprep.subr.mxu0 %v375
        %516 = vmatpush1.msra.mxu0 %v374
        %517 = vmatprep.subr.mxu0 0.0
        %518 = vmatpush1.msra.mxu0 0.0
        %519 = vmatprep.subr.mxu0 0.0
        %520 = vmatpush1.msra.mxu0 0.0
        %521 = vmatprep.subr.mxu0 0.0
        %522 = vmatpush1.msra.mxu0 0.0
        %523 = vmatprep.subr.mxu0 0.0
        %524 = vmatpush1.msra.mxu0 0.0
        %525 = vmatprep.subr.mxu0 0.0
        %526 = vmatpush1.msra.mxu0 0.0
        %527 = vmatprep.subr.mxu0 0.0
        %528 = vmatpush1.msra.mxu0 0.0
        %529 = vmatprep.subr.mxu0 0.0
        %530 = vmatpush1.msra.mxu0 0.0
        %531 = vmatprep.subr.mxu0 0.0
        %532 = vmatpush1.msra.mxu0 0.0
        %533 = vmatprep.subr.mxu0 0.0
        %534 = vmatpush1.msra.mxu0 0.0
        %535 = vmatprep.subr.mxu0 0.0
        %536 = vmatpush1.msra.mxu0 0.0
        %537 = vmatprep.subr.mxu0 0.0
        %538 = vmatpush1.msra.mxu0 0.0
        %539 = vmatprep.subr.mxu0 0.0
        %540 = vmatpush1.msra.mxu0 0.0
        %541 = vmatprep.subr.mxu0 0.0
        %542 = vmatpush1.msra.mxu0 0.0
        %543 = vmatprep.subr.mxu0 0.0
        %544 = vmatpush1.msra.mxu0 0.0
        %545 = vmatprep.subr.mxu0 0.0
        %546 = vmatpush1.msra.mxu0 0.0
        %547 = vmatprep.subr.mxu0 0.0
        %548 = vmatpush1.msra.mxu0 0.0
        %549 = vmatprep.subr.mxu0 0.0
        %550 = vmatpush1.msra.mxu0 0.0
        %551 = vmatprep.subr.mxu0 0.0
        %552 = vmatpush1.msra.mxu0 0.0
        %553 = vmatprep.subr.mxu0 0.0
        %554 = vmatpush1.msra.mxu0 0.0
        %555 = vmatprep.subr.mxu0 0.0
        %556 = vmatpush1.msra.mxu0 0.0
        %557 = vmatprep.subr.mxu0 0.0
        %558 = vmatpush1.msra.mxu0 0.0
        %559 = vmatprep.subr.mxu0 0.0
        %560 = vmatpush1.msra.mxu0 0.0
        %561 = vmatprep.subr.mxu0 0.0
        %562 = vmatpush1.msra.mxu0 0.0
        %563 = vmatprep.subr.mxu0 0.0
        %564 = vmatpush1.msra.mxu0 0.0
        %565 = vmatprep.subr.mxu0 0.0
        %566 = vmatpush1.msra.mxu0 0.0
        %567 = vmatprep.subr.mxu0 0.0
        %568 = vmatpush1.msra.mxu0 0.0
        %569 = vmatprep.subr.mxu0 0.0
        %570 = vmatpush1.msra.mxu0 0.0
        %571 = vmatprep.subr.mxu0 0.0
        %572 = vmatpush1.msra.mxu0 0.0
        %573 = vmatprep.subr.mxu0 0.0
        %574 = vmatpush1.msra.mxu0 0.0
        %575 = vmatprep.subr.mxu0 0.0
        %576 = vmatpush1.msra.mxu0 0.0
        %577 = vmatprep.mubr.f32.mxu0 0.0
        %578 = vmatmul.mubr.f32.gmra.mrb[0].mxu0 %v490
        %v579 = vpop.f32.mrb[0].mxu0
        %v580 = vadd.f32 0.0, %v579
        %v581 = vpop.f32.mrb[0].mxu0
        %v582 = vadd.f32 0.0, %v581
        %583 = vmatprep.mubr.f32.mxu0 0.0
        %584 = vmatmul.mubr.f32.gmra.mrb[0].mxu0 %v493
        %v585 = vpop.f32.mrb[0].mxu0
        %v586 = vadd.f32 0.0, %v585
        %v587 = vpop.f32.mrb[0].mxu0
        %v588 = vadd.f32 0.0, %v587
        %589 = vmatprep.mubr.f32.mxu0 0.0
        %590 = vmatmul.mubr.f32.gmra.mrb[0].mxu0 %v496
        %v591 = vpop.f32.mrb[0].mxu0
        %v592 = vadd.f32 0.0, %v591
        %v593 = vpop.f32.mrb[0].mxu0
        %v594 = vadd.f32 0.0, %v593
        %595 = vmatprep.mubr.f32.mxu0 0.0
        %596 = vmatmul.mubr.f32.gmra.mrb[0].mxu0 %v499
        %v597 = vpop.f32.mrb[0].mxu0
        %v598 = vadd.f32 0.0, %v597
        %v599 = vpop.f32.mrb[0].mxu0
        %v600 = vadd.f32 0.0, %v599
        %601 = vmatprep.mubr.f32.mxu0 0.0
        %602 = vmatmul.mubr.f32.gmra.mrb[0].mxu0 %v502
        %v603 = vpop.f32.mrb[0].mxu0
        %v604 = vadd.f32 0.0, %v603
        %v605 = vpop.f32.mrb[0].mxu0
        %v606 = vadd.f32 0.0, %v605
        %607 = vmatprep.mubr.f32.mxu0 0.0
        %608 = vmatmul.mubr.f32.gmra.mrb[0].mxu0 %v505
        %v609 = vpop.f32.mrb[0].mxu0
        %v610 = vadd.f32 0.0, %v609
        %v611 = vpop.f32.mrb[0].mxu0
        %v612 = vadd.f32 0.0, %v611
        %613 = vmatprep.mubr.f32.mxu0 0.0
        %614 = vmatmul.mubr.f32.gmra.mrb[0].mxu0 %v508
        %v615 = vpop.f32.mrb[0].mxu0
        %v616 = vadd.f32 0.0, %v615
        %v617 = vpop.f32.mrb[0].mxu0
        %v618 = vadd.f32 0.0, %v617
        %619 = vmatprep.mubr.f32.mxu0 0.0
        %620 = vmatmul.mubr.f32.gmra.mrb[0].mxu0 %v511
        %v621 = vpop.f32.mrb[0].mxu0
        %v622 = vadd.f32 0.0, %v621
        %v623 = vpop.f32.mrb[0].mxu0
        %v624 = vadd.f32 0.0, %v623
        %625 = vdwg.mxu0
        %v626 = vmul.f32 %v580, %v476
        %v627 = vmul.f32 %v582, %v477
        %v628 = vmul.f32 %v586, %v478
        %v629 = vmul.f32 %v588, %v479
        %v630 = vmul.f32 %v592, %v476
        %v631 = vmul.f32 %v594, %v477
        %v632 = vmul.f32 %v598, %v478
        %v633 = vmul.f32 %v600, %v479
        %v634 = vmul.f32 %v604, %v476
        %v635 = vmul.f32 %v606, %v477
        %v636 = vmul.f32 %v610, %v478
        %v637 = vmul.f32 %v612, %v479
        %v638 = vmul.f32 %v616, %v476
        %v639 = vmul.f32 %v618, %v477
        %v640 = vmul.f32 %v622, %v478
        %v641 = vmul.f32 %v624, %v479
        %v642 = vadd.f32 %v626, %v628
        %v643 = vrot.slane %v642, 4
        %v644 = vadd.f32 %v642, %v643
        %v645 = vrot.slane %v644, 2
        %v646 = vadd.f32 %v644, %v645
        %v647 = vrot.slane %v646, 1
        %v648 = vadd.f32 %v646, %v647
        %v649 = vadd.f32 %v627, %v629
        %v650 = vrot.slane %v649, 4
        %v651 = vadd.f32 %v649, %v650
        %v652 = vrot.slane %v651, 2
        %v653 = vadd.f32 %v651, %v652
        %v654 = vrot.slane %v653, 1
        %v655 = vadd.f32 %v653, %v654
        %v656 = vadd.f32 %v630, %v632
        %v657 = vrot.slane %v656, 4
        %v658 = vadd.f32 %v656, %v657
        %v659 = vrot.slane %v658, 2
        %v660 = vadd.f32 %v658, %v659
        %v661 = vrot.slane %v660, 1
        %v662 = vadd.f32 %v660, %v661
        %v663 = vadd.f32 %v631, %v633
        %v664 = vrot.slane %v663, 4
        %v665 = vadd.f32 %v663, %v664
        %v666 = vrot.slane %v665, 2
        %v667 = vadd.f32 %v665, %v666
        %v668 = vrot.slane %v667, 1
        %v669 = vadd.f32 %v667, %v668
        %v670 = vadd.f32 %v634, %v636
        %v671 = vrot.slane %v670, 4
        %v672 = vadd.f32 %v670, %v671
        %v673 = vrot.slane %v672, 2
        %v674 = vadd.f32 %v672, %v673
        %v675 = vrot.slane %v674, 1
        %v676 = vadd.f32 %v674, %v675
        %v677 = vadd.f32 %v635, %v637
        %v678 = vrot.slane %v677, 4
        %v679 = vadd.f32 %v677, %v678
        %v680 = vrot.slane %v679, 2
        %v681 = vadd.f32 %v679, %v680
        %v682 = vrot.slane %v681, 1
        %v683 = vadd.f32 %v681, %v682
        %v684 = vadd.f32 %v638, %v640
        %v685 = vrot.slane %v684, 4
        %v686 = vadd.f32 %v684, %v685
        %v687 = vrot.slane %v686, 2
        %v688 = vadd.f32 %v686, %v687
        %v689 = vrot.slane %v688, 1
        %v690 = vadd.f32 %v688, %v689
        %v691 = vadd.f32 %v639, %v641
        %v692 = vrot.slane %v691, 4
        %v693 = vadd.f32 %v691, %v692
        %v694 = vrot.slane %v693, 2
        %v695 = vadd.f32 %v693, %v694
        %v696 = vrot.slane %v695, 1
        %v697 = vadd.f32 %v695, %v696
        %v706 = vcombine.low %v648, %v655
        %v707 = vcombine.low %v662, %v669
        %v708 = vcombine.low %v676, %v683
        %v709 = vcombine.low %v690, %v697
        %v710 = vrot.slane %v707, 7
        %vm711 = vcmask 1041409
        %v712 = vsel %vm711, %v710, %v706
        %vm713 = vcmask 1045509
        %v714 = vsel %vm713, %v710, %v712
        %v715 = vrot.slane %v708, 6
        %vm716 = vcmask 1042434
        %v717 = vsel %vm716, %v715, %v714
        %vm718 = vcmask 1046534
        %v719 = vsel %vm718, %v715, %v717
        %v720 = vrot.slane %v709, 5
        %vm721 = vcmask 1043459
        %v722 = vsel %vm721, %v720, %v719
        %vm723 = vcmask 1047559
        %v724 = vsel %vm723, %v720, %v722
        %726 = vst [vmem:[%s219] sm:$0xff] %v724
        %s727 = sand.u32 %s119, 1
        %s728 = scalar_lea.sflag [#allocation3], %s727
        %s729 = sand.u32 %s119, 1
        %s730 = smul.addr %s729, 8
        %s731 = scalar_lea.vmem [#allocation2], %s730
        // Predicated region
        $region33: #{tpu_custom_call.1} parent=31 // pred_check
          %p732 = pneg %p129
        $region34: #{tpu_custom_call.1} parent=31 // pred_check_branch
          %734 = sbr.rel (%p732) target = $region36
        $region35: #{tpu_custom_call.1} parent=31 // pred_region
          %s735 = smul.u32 2, %s22
          %s737 = ssub.s32 128, 128
          %738 = vsyncadd %s728, %s737
          %s739 = smul.addr %s21, 2
          %s740 = sadd.s32 %s735, %s739
          %s741 = smul.addr %s740, 64
          %s742 = scalar_lea.hbm %s3, %s741
          %s744 = sshll.u32 %s731, 4
          %s745 = int_to_ptr.vmem [resolvable:$true] %s744
          %747 = dma.vmem_to_hbm [thread:$0]  %s745, 128, %s742, %s728
        $region36: #{tpu_custom_call.1} parent=31 // pred_fallthru
          _
      $region32: #{tpu_custom_call.1} parent=5 // pred_fallthru
        _
      %p748 = scmp.le.s32.totalorder 2, %s12
      // Predicated region
      $region37: #{tpu_custom_call.1} parent=5 // pred_check
        %p749 = pneg %p748
      $region38: #{tpu_custom_call.1} parent=5 // pred_check_branch
        %751 = sbr.rel (%p749) target = $region40
      $region39: #{tpu_custom_call.1} parent=5 // pred_region
        %s752 = ssub.s32 %s12, 2
        // Predicated region
        $region41: #{tpu_custom_call.1} parent=39 // pred_check
          %p753 = pneg %p135
        $region42: #{tpu_custom_call.1} parent=39 // pred_check_branch
          %755 = sbr.rel (%p753) target = $region44
        $region43: #{tpu_custom_call.1} parent=39 // pred_region
          %s756 = sand.u32 %s120, 1
          %s757 = scalar_lea.sflag [#allocation3], %s756
          %s758 = sand.u32 %s120, 1
          %s759 = smul.addr %s758, 8
          %s760 = scalar_lea.vmem [#allocation2], %s759
          %761 = dma.done %s757, 128
        $region44: #{tpu_custom_call.1} parent=39 // pred_fallthru
          _
      $region40: #{tpu_custom_call.1} parent=5 // pred_fallthru
        _
    $region6: #{tpu_custom_call.1} parent=1 // loop_footer
      %s16 = sadd.s32 1, %s12
    $region7: #{tpu_custom_call.1} parent=1 // loop_footer_branch
      %11 = sbr.rel target = $region3
    $region8: #{tpu_custom_call.1} parent=1 // loop_exit
      _
    %762 = vsyncpa [#allocation3], 1
    %s763 = scalar_lea.sflag [#allocation3], 1
    %764 = vsyncpa %s763, 1

</llo_original>
